<compile_context>
chip_gen: v5e
topology: v5e:2x2
jax: 0.10.0
libtpu: 0.0.40
codegen_flags: <defaults>
</compile_context>

<pallas_src>
import functools

import jax
import jax.numpy as jnp
import numpy as np
from jax import lax
from jax.experimental import pallas as pl
from jax.experimental.pallas import tpu as pltpu


def _round_up(v, m):
    return ((v + m - 1) // m) * m


# ---------------------------------------------------------------------------
# Fused kernel: per image -> MLP(x), MLP(ref_x), x @ ref_x^T
# ---------------------------------------------------------------------------
def _fused_track_kernel(*refs, num_fcs):
    # refs: x_ref, ref_ref, (wT_0, b_0, ..., wT_{num_fcs-1}, b_{num_fcs-1}), out_ref
    x_ref, r_ref = refs[0], refs[1]
    w_refs = refs[2:2 + 2 * num_fcs]
    out_ref = refs[2 + 2 * num_fcs]

    def mlp(h):
        # h: (rows, Din) f32.  bf16 MXU operands, f32 accumulation + f32 epilogue.
        for idx in range(num_fcs):
            wT = w_refs[2 * idx][...]            # (d_in, d_out) bf16, pre-transposed
            b = w_refs[2 * idx + 1][...]         # (1, d_out)   f32
            h = jnp.dot(h.astype(wT.dtype), wT,
                        preferred_element_type=jnp.float32) + b
            if idx < num_fcs - 1:
                h = jnp.maximum(h, 0.0)
        return h

    y_x = mlp(x_ref[...])                        # (m_pad, H) f32
    y_r = mlp(r_ref[...])                        # (k_pad, H) f32

    # trans_b matmul: contract the feature dims directly, no materialized transpose.
    prod = lax.dot_general(
        y_x.astype(jnp.bfloat16), y_r.astype(jnp.bfloat16),
        dimension_numbers=(((1,), (1,)), ((), ())),
        preferred_element_type=jnp.float32)      # (m_pad, k_pad)

    out_ref[...] = prod.astype(out_ref.dtype)    # lane-dense store (k_pad % 128 == 0)


def fused_track_forward(x_pad, ref_pad, weights_T, biases):
    """x_pad:(n,m_pad,Din) ref_pad:(n,k_pad,Din) -> (n,m_pad,k_pad) f32."""
    n, m_pad, d_in = x_pad.shape
    k_pad = ref_pad.shape[1]
    num_fcs = len(weights_T)

    in_specs = [
        pl.BlockSpec((None, m_pad, d_in), lambda i: (i, 0, 0)),
        pl.BlockSpec((None, k_pad, d_in), lambda i: (i, 0, 0)),
    ]
    w_args = []
    for wT, b in zip(weights_T, biases):
        in_specs.append(pl.BlockSpec(wT.shape, lambda i: (0, 0)))  # resident across grid
        in_specs.append(pl.BlockSpec(b.shape, lambda i: (0, 0)))
        w_args += [wT, b]

    kernel = functools.partial(_fused_track_kernel, num_fcs=num_fcs)
    return pl.pallas_call(
        kernel,
        out_shape=jax.ShapeDtypeStruct((n, m_pad, k_pad), jnp.float32),
        grid_spec=pltpu.PrefetchScalarGridSpec(
            num_scalar_prefetch=0,
            grid=(n,),
            in_specs=in_specs,
            out_specs=pl.BlockSpec((None, m_pad, k_pad), lambda i: (i, 0, 0)),
        ),
        compiler_params=pltpu.CompilerParams(
            dimension_semantics=("parallel",)),   # v7x: split images across the 2 TCs
    )(x_pad, ref_pad, *w_args)


# ---------------------------------------------------------------------------
# Wrapper glue: flatten + per-image padding + dummy column + slicing
# ---------------------------------------------------------------------------
def _pad_segments(feat, counts, rows_pad):
    """feat:(total,D) -> (n, rows_pad, D); segment i copied into rows [0:counts[i])."""
    n = len(counts)
    d = feat.shape[1]
    out = jnp.zeros((n, rows_pad, d), feat.dtype)
    off = 0
    for i, c in enumerate(counts):
        if c > 0:
            out = out.at[i, :c, :].set(feat[off:off + c])
        off += c
    return out


class TrackHeadDeepSortKalmanOnlyPallas:
    def __init__(self, num_fcs=2, in_channels=4, roi_feat_size=4,
                 fc_out_channels=128, with_avg_pool=False, dynamic=True,
                 key=jax.random.PRNGKey(0)):
        assert not with_avg_pool, "with_avg_pool=False path implemented"
        self.num_fcs = num_fcs
        self.dynamic = dynamic
        flat_in = in_channels * roi_feat_size * roi_feat_size
        # nn.init.normal_(fc.weight, 0, 0.01); bias = 0.
        # Weights stored pre-transposed (d_in, d_out) and in bf16 (MXU operands);
        # biases stay f32 for the f32 epilogue.
        self.weights_T = []
        self.biases = []
        d_in = flat_in
        for _ in range(num_fcs):
            key, sub = jax.random.split(key)
            w = 0.01 * jax.random.normal(sub, (fc_out_channels, d_in), jnp.float32)
            self.weights_T.append(w.T.astype(jnp.bfloat16))
            self.biases.append(jnp.zeros((1, fc_out_channels), jnp.float32))
            d_in = fc_out_channels

    def forward(self, x, ref_x, x_n, ref_x_n):
        assert len(x_n) == len(ref_x_n)
        n = len(x_n)

        # flatten NCHW -> (N, C*H*W), same row-major order as torch .view
        x = x.reshape(x.shape[0], -1).astype(jnp.float32)
        ref_x = ref_x.reshape(ref_x.shape[0], -1).astype(jnp.float32)

        # one padded block size shared by every image -> one compiled kernel
        m_pad = _round_up(max(max(x_n), 1), 8)       # sublane-aligned rows
        k_pad = _round_up(max(max(ref_x_n), 1), 128)  # lane-dense output columns

        x_pad = _pad_segments(x, x_n, m_pad)          # (n, m_pad, Din)
        ref_pad = _pad_segments(ref_x, ref_x_n, k_pad)  # (n, k_pad, Din)

        slab = fused_track_forward(x_pad, ref_pad, self.weights_T, self.biases)

        # dummy zero column prepended once, outside the kernel (keeps in-kernel store lane-dense)
        slab = jnp.pad(slab, ((0, 0), (0, 0), (1, 0)))

        assert self.dynamic  # TODO(synk): non-dynamic branch references undefined `m` in the reference code
        return [slab[i, :x_n[i], :ref_x_n[i] + 1] for i in range(n)]


# ---------------------------------------------------------------------------
# Demo / smoke test
# ---------------------------------------------------------------------------
def _reference(x, ref_x, x_n, ref_x_n, weights_T, biases):
    """Pure-JAX f32 reference of the PyTorch forward (for a loose sanity check)."""
    x = x.reshape(x.shape[0], -1).astype(jnp.float32)
    ref_x = ref_x.reshape(ref_x.shape[0], -1).astype(jnp.float32)
    for idx, (wT, b) in enumerate(zip(weights_T, biases)):
        wT = wT.astype(jnp.float32)
        x = x @ wT + b
        ref_x = ref_x @ wT + b
        if idx < len(weights_T) - 1:
            x = jnp.maximum(x, 0.0)
            ref_x = jnp.maximum(ref_x, 0.0)
    out = []
    xo = ro = 0
    for m, k in zip(x_n, ref_x_n):
        prod = x[xo:xo + m] @ ref_x[ro:ro + k].T
        out.append(jnp.concatenate([jnp.zeros((m, 1), jnp.float32), prod], axis=1))
        xo += m
        ro += k
    return out


if __name__ == "__main__":
    key = jax.random.PRNGKey(0)
    k1, k2, k3 = jax.random.split(key, 3)

    # small, forward-consistent shapes
    C, H, W = 4, 4, 4          # in_channels=4, roi_feat_size=4 -> 64-d flat feature
    x_n = [4, 4]               # 8 current-frame proposals over 2 images
    ref_x_n = [3, 3]           # 6 reference-frame proposals over 2 images
    N, M = sum(x_n), sum(ref_x_n)

    x = jax.random.normal(k1, (N, C, H, W), jnp.float32)
    ref_x = jax.random.normal(k2, (M, C, H, W), jnp.float32)

    head = TrackHeadDeepSortKalmanOnlyPallas(
        num_fcs=2, in_channels=C, roi_feat_size=H, fc_out_channels=128, key=k3)

    out = head.forward(x, ref_x, x_n, ref_x_n)
    out = [jax.block_until_ready(o) for o in out]

    # sanity: shapes (m_i, k_i + 1), dummy column is zeros, values match f32 reference
    ref_out = _reference(x, ref_x, x_n, ref_x_n, head.weights_T, head.biases)
    for o, r, m_i, k_i in zip(out, ref_out, x_n, ref_x_n):
        assert o.shape == (m_i, k_i + 1), o.shape
        assert bool(jnp.all(o[:, 0] == 0.0))
        np.testing.assert_allclose(np.asarray(o), np.asarray(r), rtol=5e-2, atol=1e-3)

    print("KERNEL_OK")
</pallas_src>

<mosaic_0001>
module attributes {stable_mosaic.version = 11 : i64} {
  func.func @_fused_track_kernel(%arg0: i32, %arg1: memref<1x8x64xf32, #tpu.memory_space<vmem>>, %arg2: memref<1x128x64xf32, #tpu.memory_space<vmem>>, %arg3: memref<64x128xbf16, #tpu.memory_space<vmem>>, %arg4: memref<1x128xf32, #tpu.memory_space<vmem>>, %arg5: memref<128x128xbf16, #tpu.memory_space<vmem>>, %arg6: memref<1x128xf32, #tpu.memory_space<vmem>>, %arg7: memref<1x8x128xf32, #tpu.memory_space<vmem>>) attributes {dimension_semantics = [#tpu.dimension_semantics<parallel>], iteration_bounds = array<i64: 2>, scalar_prefetch = 0 : i64, scratch_operands = 0 : i64, tpu.core_type = #tpu.core_type<tc>, window_params = [{transform_indices = @transform_0, window_bounds = array<i64: 1, 8, 64>}, {transform_indices = @transform_1, window_bounds = array<i64: 1, 128, 64>}, {pipeline_mode = #tpu.pipeline_mode<synchronous>, transform_indices = @transform_2, window_bounds = array<i64: 64, 128>}, {pipeline_mode = #tpu.pipeline_mode<synchronous>, transform_indices = @transform_3, window_bounds = array<i64: 1, 128>}, {pipeline_mode = #tpu.pipeline_mode<synchronous>, transform_indices = @transform_4, window_bounds = array<i64: 128, 128>}, {pipeline_mode = #tpu.pipeline_mode<synchronous>, transform_indices = @transform_5, window_bounds = array<i64: 1, 128>}, {transform_indices = @transform_6, window_bounds = array<i64: 1, 8, 128>}]} {
    %c0 = arith.constant 0 : index
    %c0_0 = arith.constant 0 : index
    %c0_1 = arith.constant 0 : index
    %0 = vector.load %arg1[%c0, %c0_0, %c0_1] : memref<1x8x64xf32, #tpu.memory_space<vmem>>, vector<1x8x64xf32>
    %1 = vector.shape_cast %0 : vector<1x8x64xf32> to vector<8x64xf32>
    %c0_2 = arith.constant 0 : index
    %c0_3 = arith.constant 0 : index
    %2 = vector.load %arg3[%c0_2, %c0_3] : memref<64x128xbf16, #tpu.memory_space<vmem>>, vector<64x128xbf16>
    %c0_4 = arith.constant 0 : index
    %c0_5 = arith.constant 0 : index
    %3 = vector.load %arg4[%c0_4, %c0_5] : memref<1x128xf32, #tpu.memory_space<vmem>>, vector<1x128xf32>
    %4 = arith.truncf %1 : vector<8x64xf32> to vector<8x64xbf16>
    %cst = arith.constant dense<0.000000e+00> : vector<8x128xf32>
    %5 = tpu.matmul %4, %2, %cst {dimension_numbers = #tpu.dot_dimension_numbers<[1], [0], [0], [1], [0, 0, 1, 1], [], []>} : vector<8x64xbf16>, vector<64x128xbf16>, vector<8x128xf32> -> vector<8x128xf32>
    %6 = vector.broadcast %3 : vector<1x128xf32> to vector<8x128xf32>
    %7 = arith.addf %5, %6 : vector<8x128xf32>
    %cst_6 = arith.constant 0.000000e+00 : f32
    %8 = vector.broadcast %cst_6 : f32 to vector<8x128xf32>
    %9 = arith.maximumf %7, %8 : vector<8x128xf32>
    %c0_7 = arith.constant 0 : index
    %c0_8 = arith.constant 0 : index
    %10 = vector.load %arg5[%c0_7, %c0_8] : memref<128x128xbf16, #tpu.memory_space<vmem>>, vector<128x128xbf16>
    %c0_9 = arith.constant 0 : index
    %c0_10 = arith.constant 0 : index
    %11 = vector.load %arg6[%c0_9, %c0_10] : memref<1x128xf32, #tpu.memory_space<vmem>>, vector<1x128xf32>
    %12 = arith.truncf %9 : vector<8x128xf32> to vector<8x128xbf16>
    %cst_11 = arith.constant dense<0.000000e+00> : vector<8x128xf32>
    %13 = tpu.matmul %12, %10, %cst_11 {dimension_numbers = #tpu.dot_dimension_numbers<[1], [0], [0], [1], [0, 0, 1, 1], [], []>} : vector<8x128xbf16>, vector<128x128xbf16>, vector<8x128xf32> -> vector<8x128xf32>
    %14 = vector.broadcast %11 : vector<1x128xf32> to vector<8x128xf32>
    %15 = arith.addf %13, %14 : vector<8x128xf32>
    %c0_12 = arith.constant 0 : index
    %c0_13 = arith.constant 0 : index
    %c0_14 = arith.constant 0 : index
    %16 = vector.load %arg2[%c0_12, %c0_13, %c0_14] : memref<1x128x64xf32, #tpu.memory_space<vmem>>, vector<1x128x64xf32>
    %17 = vector.shape_cast %16 : vector<1x128x64xf32> to vector<128x64xf32>
    %c0_15 = arith.constant 0 : index
    %c0_16 = arith.constant 0 : index
    %18 = vector.load %arg3[%c0_15, %c0_16] : memref<64x128xbf16, #tpu.memory_space<vmem>>, vector<64x128xbf16>
    %c0_17 = arith.constant 0 : index
    %c0_18 = arith.constant 0 : index
    %19 = vector.load %arg4[%c0_17, %c0_18] : memref<1x128xf32, #tpu.memory_space<vmem>>, vector<1x128xf32>
    %20 = arith.truncf %17 : vector<128x64xf32> to vector<128x64xbf16>
    %cst_19 = arith.constant dense<0.000000e+00> : vector<128x128xf32>
    %21 = tpu.matmul %20, %18, %cst_19 {dimension_numbers = #tpu.dot_dimension_numbers<[1], [0], [0], [1], [0, 0, 1, 1], [], []>} : vector<128x64xbf16>, vector<64x128xbf16>, vector<128x128xf32> -> vector<128x128xf32>
    %22 = vector.broadcast %19 : vector<1x128xf32> to vector<128x128xf32>
    %23 = arith.addf %21, %22 : vector<128x128xf32>
    %cst_20 = arith.constant 0.000000e+00 : f32
    %24 = vector.broadcast %cst_20 : f32 to vector<128x128xf32>
    %25 = arith.maximumf %23, %24 : vector<128x128xf32>
    %c0_21 = arith.constant 0 : index
    %c0_22 = arith.constant 0 : index
    %26 = vector.load %arg5[%c0_21, %c0_22] : memref<128x128xbf16, #tpu.memory_space<vmem>>, vector<128x128xbf16>
    %c0_23 = arith.constant 0 : index
    %c0_24 = arith.constant 0 : index
    %27 = vector.load %arg6[%c0_23, %c0_24] : memref<1x128xf32, #tpu.memory_space<vmem>>, vector<1x128xf32>
    %28 = arith.truncf %25 : vector<128x128xf32> to vector<128x128xbf16>
    %cst_25 = arith.constant dense<0.000000e+00> : vector<128x128xf32>
    %29 = tpu.matmul %28, %26, %cst_25 {dimension_numbers = #tpu.dot_dimension_numbers<[1], [0], [0], [1], [0, 0, 1, 1], [], []>} : vector<128x128xbf16>, vector<128x128xbf16>, vector<128x128xf32> -> vector<128x128xf32>
    %30 = vector.broadcast %27 : vector<1x128xf32> to vector<128x128xf32>
    %31 = arith.addf %29, %30 : vector<128x128xf32>
    %32 = arith.truncf %15 : vector<8x128xf32> to vector<8x128xbf16>
    %33 = arith.truncf %31 : vector<128x128xf32> to vector<128x128xbf16>
    %cst_26 = arith.constant dense<0.000000e+00> : vector<8x128xf32>
    %34 = tpu.matmul %32, %33, %cst_26 {dimension_numbers = #tpu.dot_dimension_numbers<[1], [1], [0], [0], [0, 0, 1, 0], [], []>} : vector<8x128xbf16>, vector<128x128xbf16>, vector<8x128xf32> -> vector<8x128xf32>
    %c0_27 = arith.constant 0 : index
    %c0_28 = arith.constant 0 : index
    %c0_29 = arith.constant 0 : index
    %35 = vector.load %arg7[%c0_27, %c0_28, %c0_29] : memref<1x8x128xf32, #tpu.memory_space<vmem>>, vector<1x8x128xf32>
    %36 = vector.shape_cast %35 : vector<1x8x128xf32> to vector<8x128xf32>
    %37 = vector.shape_cast %34 : vector<8x128xf32> to vector<1x8x128xf32>
    tpu.vector_store %arg7[%c0_27, %c0_28, %c0_29], %37 {strides = array<i32>} : memref<1x8x128xf32, #tpu.memory_space<vmem>>, vector<1x8x128xf32>,
    return
  }
  func.func @transform_0(%arg0: i32) -> (i32, i32, i32) {
    %c0_i32 = arith.constant 0 : i32
    %c0_i32_0 = arith.constant 0 : i32
    %c0_i32_1 = arith.constant 0 : i32
    return %arg0, %c0_i32, %c0_i32_0 : i32, i32, i32
  }
  func.func @transform_1(%arg0: i32) -> (i32, i32, i32) {
    %c0_i32 = arith.constant 0 : i32
    %c0_i32_0 = arith.constant 0 : i32
    %c0_i32_1 = arith.constant 0 : i32
    return %arg0, %c0_i32, %c0_i32_0 : i32, i32, i32
  }
  func.func @transform_2(%arg0: i32) -> (i32, i32) {
    %c0_i32 = arith.constant 0 : i32
    %c0_i32_0 = arith.constant 0 : i32
    %c0_i32_1 = arith.constant 0 : i32
    return %c0_i32, %c0_i32_0 : i32, i32
  }
  func.func @transform_3(%arg0: i32) -> (i32, i32) {
    %c0_i32 = arith.constant 0 : i32
    %c0_i32_0 = arith.constant 0 : i32
    %c0_i32_1 = arith.constant 0 : i32
    return %c0_i32, %c0_i32_0 : i32, i32
  }
  func.func @transform_4(%arg0: i32) -> (i32, i32) {
    %c0_i32 = arith.constant 0 : i32
    %c0_i32_0 = arith.constant 0 : i32
    %c0_i32_1 = arith.constant 0 : i32
    return %c0_i32, %c0_i32_0 : i32, i32
  }
  func.func @transform_5(%arg0: i32) -> (i32, i32) {
    %c0_i32 = arith.constant 0 : i32
    %c0_i32_0 = arith.constant 0 : i32
    %c0_i32_1 = arith.constant 0 : i32
    return %c0_i32, %c0_i32_0 : i32, i32
  }
  func.func @transform_6(%arg0: i32) -> (i32, i32, i32) {
    %c0_i32 = arith.constant 0 : i32
    %c0_i32_0 = arith.constant 0 : i32
    %c0_i32_1 = arith.constant 0 : i32
    return %arg0, %c0_i32, %c0_i32_0 : i32, i32, i32
  }
}

</mosaic_0001>

<llo_original>
// kernel: tpu_custom_call.1
$region0: #{tpu_custom_call.1}
  #allocation0 [shape = 'u32[]', space=smem, size = 0x4, offset = 0x4, fixed_abs, tag = 'smem constant byte address 0x4 - core index']
  #allocation1 [shape = 'u32[72,128]{1,0:T(1,128)}', space=vmem, size = 0x9000, scoped, tag = 'internal scratch']
  %s0 = inlined_call_operand.vmem [shape: f32[2,8,64], index: 0, kind: input, shape index: {}]
  %s1 = inlined_call_operand.vmem [shape: f32[2,128,64], index: 1, kind: input, shape index: {}]
  %s2 = inlined_call_operand.vmem [shape: bf16[64,128], index: 2, kind: input, shape index: {}]
  %s3 = inlined_call_operand.vmem [shape: f32[1,128], index: 3, kind: input, shape index: {}]
  %s4 = inlined_call_operand.vmem [shape: bf16[128,128], index: 4, kind: input, shape index: {}]
  %s5 = inlined_call_operand.vmem [shape: f32[1,128], index: 5, kind: input, shape index: {}]
  %s6 = inlined_call_operand.hbm [shape: f32[2,8,128], index: 6, kind: output, shape index: {}]
  %s7 = sld [smem:[#allocation0]]
  $region57: #{tpu_custom_call.1} parent=0
    _
  %s9 = ssub.s32 1, %s7
  %s10 = scalar_select 0, %s9, %s7
  $region1: #{tpu_custom_call.1} parent=0
    #allocation2 [shape = 'u8[8192]{0}', space=vmem, size = 0x2000, scoped, tag = 'output window, operand 0']
    #allocation3 [shape = 's32[2]{0}', space=sflag, size = 0x8, scoped, tag = 'scoped memory for tpu_custom_call.1']
    %11 = vsyncpa [#allocation3], 0
    %s12 = scalar_lea.sflag [#allocation3], 1
    %13 = vsyncpa %s12, 0
    loop: start=0, step=1, limit=4
    $region2: #{tpu_custom_call.1} parent=1 // loop_pre_header
      _
    $region3: #{tpu_custom_call.1} parent=1 // loop_header
      %s15 = sphi 0, %s19
      %p16 = scmp.ge.s32.totalorder %s15, 4
      %s25 = sphi 0, %s27
      %s28 = sphi 0, %s25
      %s29 = sphi 0, %s28
      %s45 = sphi 0, %s29
      %s51 = sphi 0, %s53
      %s54 = sphi 0, %s51
      %s55 = sphi 0, %s54
      %s71 = sphi 0, %s55
      %s75 = sphi 0, %s75
      %s77 = sphi 0, %s75
      %s78 = sphi 0, %s77
      %s92 = sphi 0, %s78
      %s96 = sphi 0, %s96
      %s98 = sphi 0, %s96
      %s99 = sphi 0, %s98
      %s113 = sphi 0, %s99
      %s117 = sphi 0, %s117
      %s119 = sphi 0, %s117
      %s120 = sphi 0, %s119
      %s134 = sphi 0, %s120
      %s138 = sphi 0, %s138
      %s140 = sphi 0, %s138
      %s141 = sphi 0, %s140
      %s155 = sphi 0, %s141
      %s161 = sphi 0, %s163
      %s164 = sphi 0, %s161
      %s165 = sphi 0, %s164
      %s181 = sphi 0, %s165
    $region4: #{tpu_custom_call.1} parent=1 // loop_header_branch
      %18 = sbr.rel (%p16) target = $region8
    $region5: #{tpu_custom_call.1} parent=1 // loop_body
      %s20 = ssub.s32 %s15, 1
      %s21 = ssub.s32 %s15, 2
      %s22 = sadd.s32 %s15, 1
      %s23 = ssub.s32 %s15, %s22
      %p24 = scmp.eq.s32.totalorder %s23, 0
      %s26 = sadd.s32 %s25, 1
      %s27 = scalar_select %p24, %s25, %s26
      %p30 = pneg %p24
      %p31 = scmp.eq.s32.totalorder %s15, 1
      %p32 = por %p30, %p31
      %p33 = scmp.ne.s32.totalorder %s25, %s28
      %p34 = scmp.eq.s32.totalorder %s15, 0
      %p35 = por %p33, %p34
      %p36 = scmp.ne.s32.totalorder %s25, %s28
      %p37 = scmp.eq.s32.totalorder %s20, 1
      %p38 = por %p36, %p37
      %p39 = scmp.ne.s32.totalorder %s28, %s29
      %p40 = scmp.eq.s32.totalorder %s20, 0
      %p41 = por %p39, %p40
      %p42 = scmp.ne.s32.totalorder %s28, %s29
      %p43 = scmp.eq.s32.totalorder %s21, 1
      %p44 = por %p42, %p43
      %p46 = scmp.ne.s32.totalorder %s29, %s45
      %p47 = scmp.eq.s32.totalorder %s21, 0
      %p48 = por %p46, %p47
      %s49 = ssub.s32 %s15, %s22
      %p50 = scmp.eq.s32.totalorder %s49, 0
      %s52 = sadd.s32 %s51, 1
      %s53 = scalar_select %p50, %s51, %s52
      %p56 = pneg %p50
      %p57 = scmp.eq.s32.totalorder %s15, 1
      %p58 = por %p56, %p57
      %p59 = scmp.ne.s32.totalorder %s51, %s54
      %p60 = scmp.eq.s32.totalorder %s15, 0
      %p61 = por %p59, %p60
      %p62 = scmp.ne.s32.totalorder %s51, %s54
      %p63 = scmp.eq.s32.totalorder %s20, 1
      %p64 = por %p62, %p63
      %p65 = scmp.ne.s32.totalorder %s54, %s55
      %p66 = scmp.eq.s32.totalorder %s20, 0
      %p67 = por %p65, %p66
      %p68 = scmp.ne.s32.totalorder %s54, %s55
      %p69 = scmp.eq.s32.totalorder %s21, 1
      %p70 = por %p68, %p69
      %p72 = scmp.ne.s32.totalorder %s55, %s71
      %p73 = scmp.eq.s32.totalorder %s21, 0
      %p74 = por %p72, %p73
      %s76 = sadd.s32 %s75, 1
      %p79 = scmp.eq.s32.totalorder %s15, 1
      %p80 = scmp.ne.s32.totalorder %s75, %s77
      %p81 = scmp.eq.s32.totalorder %s15, 0
      %p82 = por %p80, %p81
      %p83 = scmp.ne.s32.totalorder %s75, %s77
      %p84 = scmp.eq.s32.totalorder %s20, 1
      %p85 = por %p83, %p84
      %p86 = scmp.ne.s32.totalorder %s77, %s78
      %p87 = scmp.eq.s32.totalorder %s20, 0
      %p88 = por %p86, %p87
      %p89 = scmp.ne.s32.totalorder %s77, %s78
      %p90 = scmp.eq.s32.totalorder %s21, 1
      %p91 = por %p89, %p90
      %p93 = scmp.ne.s32.totalorder %s78, %s92
      %p94 = scmp.eq.s32.totalorder %s21, 0
      %p95 = por %p93, %p94
      %s97 = sadd.s32 %s96, 1
      %p100 = scmp.eq.s32.totalorder %s15, 1
      %p101 = scmp.ne.s32.totalorder %s96, %s98
      %p102 = scmp.eq.s32.totalorder %s15, 0
      %p103 = por %p101, %p102
      %p104 = scmp.ne.s32.totalorder %s96, %s98
      %p105 = scmp.eq.s32.totalorder %s20, 1
      %p106 = por %p104, %p105
      %p107 = scmp.ne.s32.totalorder %s98, %s99
      %p108 = scmp.eq.s32.totalorder %s20, 0
      %p109 = por %p107, %p108
      %p110 = scmp.ne.s32.totalorder %s98, %s99
      %p111 = scmp.eq.s32.totalorder %s21, 1
      %p112 = por %p110, %p111
      %p114 = scmp.ne.s32.totalorder %s99, %s113
      %p115 = scmp.eq.s32.totalorder %s21, 0
      %p116 = por %p114, %p115
      %s118 = sadd.s32 %s117, 1
      %p121 = scmp.eq.s32.totalorder %s15, 1
      %p122 = scmp.ne.s32.totalorder %s117, %s119
      %p123 = scmp.eq.s32.totalorder %s15, 0
      %p124 = por %p122, %p123
      %p125 = scmp.ne.s32.totalorder %s117, %s119
      %p126 = scmp.eq.s32.totalorder %s20, 1
      %p127 = por %p125, %p126
      %p128 = scmp.ne.s32.totalorder %s119, %s120
      %p129 = scmp.eq.s32.totalorder %s20, 0
      %p130 = por %p128, %p129
      %p131 = scmp.ne.s32.totalorder %s119, %s120
      %p132 = scmp.eq.s32.totalorder %s21, 1
      %p133 = por %p131, %p132
      %p135 = scmp.ne.s32.totalorder %s120, %s134
      %p136 = scmp.eq.s32.totalorder %s21, 0
      %p137 = por %p135, %p136
      %s139 = sadd.s32 %s138, 1
      %p142 = scmp.eq.s32.totalorder %s15, 1
      %p143 = scmp.ne.s32.totalorder %s138, %s140
      %p144 = scmp.eq.s32.totalorder %s15, 0
      %p145 = por %p143, %p144
      %p146 = scmp.ne.s32.totalorder %s138, %s140
      %p147 = scmp.eq.s32.totalorder %s20, 1
      %p148 = por %p146, %p147
      %p149 = scmp.ne.s32.totalorder %s140, %s141
      %p150 = scmp.eq.s32.totalorder %s20, 0
      %p151 = por %p149, %p150
      %p152 = scmp.ne.s32.totalorder %s140, %s141
      %p153 = scmp.eq.s32.totalorder %s21, 1
      %p154 = por %p152, %p153
      %p156 = scmp.ne.s32.totalorder %s141, %s155
      %p157 = scmp.eq.s32.totalorder %s21, 0
      %p158 = por %p156, %p157
      %s159 = ssub.s32 %s15, %s22
      %p160 = scmp.eq.s32.totalorder %s159, 0
      %s162 = sadd.s32 %s161, 1
      %s163 = scalar_select %p160, %s161, %s162
      %p166 = pneg %p160
      %p167 = scmp.eq.s32.totalorder %s15, 1
      %p168 = por %p166, %p167
      %p169 = scmp.ne.s32.totalorder %s161, %s164
      %p170 = scmp.eq.s32.totalorder %s15, 0
      %p171 = por %p169, %p170
      %p172 = scmp.ne.s32.totalorder %s161, %s164
      %p173 = scmp.eq.s32.totalorder %s20, 1
      %p174 = por %p172, %p173
      %p175 = scmp.ne.s32.totalorder %s164, %s165
      %p176 = scmp.eq.s32.totalorder %s20, 0
      %p177 = por %p175, %p176
      %p178 = scmp.ne.s32.totalorder %s164, %s165
      %p179 = scmp.eq.s32.totalorder %s21, 1
      %p180 = por %p178, %p179
      %p182 = scmp.ne.s32.totalorder %s165, %s181
      %p183 = scmp.eq.s32.totalorder %s21, 0
      %p184 = por %p182, %p183
      %p185 = scmp.le.s32.totalorder 1, %s15
      %p186 = scmp.lt.s32.totalorder %s15, 3
      %p187 = pnand %p185, %p186
      %p188 = pneg %p187
      // Predicated region
      $region9: #{tpu_custom_call.1} parent=5 // pred_check
        _
      $region10: #{tpu_custom_call.1} parent=5 // pred_check_branch
        %190 = sbr.rel (%p187) target = $region12
      $region11: #{tpu_custom_call.1} parent=5 // pred_region
        %s191 = ssub.s32 %s15, 1
        // Predicated region
        $region13: #{tpu_custom_call.1} parent=11 // pred_check
          %p192 = pneg %p88
        $region14: #{tpu_custom_call.1} parent=11 // pred_check_branch
          %194 = sbr.rel (%p192) target = $region16
        $region15: #{tpu_custom_call.1} parent=11 // pred_region
          _
        $region16: #{tpu_custom_call.1} parent=11 // pred_fallthru
          _
        // Predicated region
        $region17: #{tpu_custom_call.1} parent=11 // pred_check
          %p195 = pneg %p109
        $region18: #{tpu_custom_call.1} parent=11 // pred_check_branch
          %197 = sbr.rel (%p195) target = $region20
        $region19: #{tpu_custom_call.1} parent=11 // pred_region
          _
        $region20: #{tpu_custom_call.1} parent=11 // pred_fallthru
          _
        // Predicated region
        $region21: #{tpu_custom_call.1} parent=11 // pred_check
          %p198 = pneg %p130
        $region22: #{tpu_custom_call.1} parent=11 // pred_check_branch
          %200 = sbr.rel (%p198) target = $region24
        $region23: #{tpu_custom_call.1} parent=11 // pred_region
          _
        $region24: #{tpu_custom_call.1} parent=11 // pred_fallthru
          _
        // Predicated region
        $region25: #{tpu_custom_call.1} parent=11 // pred_check
          %p201 = pneg %p151
        $region26: #{tpu_custom_call.1} parent=11 // pred_check_branch
          %203 = sbr.rel (%p201) target = $region28
        $region27: #{tpu_custom_call.1} parent=11 // pred_region
          _
        $region28: #{tpu_custom_call.1} parent=11 // pred_fallthru
          _
      $region12: #{tpu_custom_call.1} parent=5 // pred_fallthru
        _
      %p204 = scmp.lt.s32.totalorder %s15, 2
      // Predicated region
      $region29: #{tpu_custom_call.1} parent=5 // pred_check
        %p205 = pneg %p204
      $region30: #{tpu_custom_call.1} parent=5 // pred_check_branch
        %207 = sbr.rel (%p205) target = $region32
      $region31: #{tpu_custom_call.1} parent=5 // pred_region
        // Predicated region
        $region33: #{tpu_custom_call.1} parent=31 // pred_check
          %p208 = pneg %p35
        $region34: #{tpu_custom_call.1} parent=31 // pred_check_branch
          %210 = sbr.rel (%p208) target = $region36
        $region35: #{tpu_custom_call.1} parent=31 // pred_region
          %p211 = scmp.lt.s32.totalorder %s15, 1
          %s212 = scalar_select %p211, %s15, 1
          %s213 = smul.addr %s212, 8
          %s214 = scalar_lea.vmem %s0, %s213
        $region36: #{tpu_custom_call.1} parent=31 // pred_fallthru
          _
        // Predicated region
        $region37: #{tpu_custom_call.1} parent=31 // pred_check
          %p215 = pneg %p61
        $region38: #{tpu_custom_call.1} parent=31 // pred_check_branch
          %217 = sbr.rel (%p215) target = $region40
        $region39: #{tpu_custom_call.1} parent=31 // pred_region
          %p218 = scmp.lt.s32.totalorder %s15, 1
          %s219 = scalar_select %p218, %s15, 1
          %s220 = smul.addr %s219, 16
          %s221 = smul.addr %s220, 8
          %s222 = scalar_lea.vmem %s1, %s221
        $region40: #{tpu_custom_call.1} parent=31 // pred_fallthru
          _
      $region32: #{tpu_custom_call.1} parent=5 // pred_fallthru
        _
      %p223 = scmp.le.s32.totalorder 1, %s15
      %p224 = scmp.lt.s32.totalorder %s15, 3
      %p225 = pnand %p223, %p224
      %p226 = pneg %p225
      // Predicated region
      $region41: #{tpu_custom_call.1} parent=5 // pred_check
        _
      $region42: #{tpu_custom_call.1} parent=5 // pred_check_branch
        %228 = sbr.rel (%p225) target = $region44
      $region43: #{tpu_custom_call.1} parent=5 // pred_region
        %s229 = ssub.s32 %s15, 1
        %p230 = scmp.lt.s32.totalorder %s20, 1
        %s231 = scalar_select %p230, %s20, 1
        %s232 = smul.addr %s231, 8
        %s233 = scalar_lea.vmem %s0, %s232
        %p234 = pneg %p41
        %p235 = pneg %p38
        %p236 = scmp.lt.s32.totalorder %s20, 1
        %s237 = scalar_select %p236, %s20, 1
        %s238 = smul.addr %s237, 16
        %s239 = smul.addr %s238, 8
        %s240 = scalar_lea.vmem %s1, %s239
        %p241 = pneg %p67
        %p242 = pneg %p64
        %p243 = pneg %p88
        %p244 = pneg %p85
        %p245 = pneg %p109
        %p246 = pneg %p106
        %p247 = pneg %p130
        %p248 = pneg %p127
        %p249 = pneg %p151
        %p250 = pneg %p148
        %p251 = pneg %p177
        %p252 = pneg %p174
        %s253 = sand.u32 %s164, 1
        %s254 = scalar_lea.sflag [#allocation3], %s253
        %s255 = sand.u32 %s164, 1
        %s256 = smul.addr %s255, 8
        %s257 = scalar_lea.vmem [#allocation2], %s256
        %p258 = scmp.lt.s32.totalorder %s20, 1
        %s259 = scalar_select %p258, %s20, 1
        %s260 = smul.addr %s259, 8
        %s261 = scalar_lea.vmem %s0, %s260
        %p262 = scmp.lt.s32.totalorder %s20, 1
        %s263 = scalar_select %p262, %s20, 1
        %s264 = smul.addr %s263, 16
        %s265 = smul.addr %s264, 8
        %s266 = scalar_lea.vmem %s1, %s265
        %v268 = vld [vmem:[%s261] sm:$0xff]
        %v269 = vld [vmem:[%s2] sm:$0xf]
        %v270 = vld [vmem:[%s2 + $0x4] sm:$0xf]
        %v271 = vld [vmem:[%s2 + $0x8] sm:$0xf]
        %v272 = vld [vmem:[%s2 + $0xc] sm:$0xf]
        %v273 = vld [vmem:[%s2 + $0x10] sm:$0xf]
        %v274 = vld [vmem:[%s2 + $0x14] sm:$0xf]
        %v275 = vld [vmem:[%s2 + $0x18] sm:$0xf]
        %v276 = vld [vmem:[%s2 + $0x1c] sm:$0xf]
        %v277 = vld [vmem:[%s3] sm:$0x1]
        %v278 = vpack.c.bf16 %v268, %v268
        %v280 = vperm.slane %v277, 0
        %v290 = vunpack.c.l.b16 %v269
        %v291 = vunpack.c.l.b16 %v270
        %v292 = vunpack.c.l.b16 %v271
        %v293 = vunpack.c.l.b16 %v272
        %v294 = vunpack.c.l.b16 %v273
        %v295 = vunpack.c.l.b16 %v274
        %v296 = vunpack.c.l.b16 %v275
        %v297 = vunpack.c.l.b16 %v276
        %v298 = vpack.c.b16 %v291, %v290
        %v299 = vpack.c.b16 %v293, %v292
        %v300 = vpack.c.b16 %v295, %v294
        %v301 = vpack.c.b16 %v297, %v296
        %vm306 = vcmask 523264
        %v308 = vsel %vm306, %v278, 0
        %310 = vmatpush.bf16.msra.mxu0 0
        %311 = vmatpush.bf16.msra.mxu0 0
        %312 = vmatpush.bf16.msra.mxu0 0
        %313 = vmatpush.bf16.msra.mxu0 0
        %314 = vmatpush.bf16.msra.mxu0 %v301
        %315 = vmatpush.bf16.msra.mxu0 %v300
        %316 = vmatpush.bf16.msra.mxu0 %v299
        %317 = vmatpush.bf16.msra.mxu0 %v298
        %318 = vmatmul.bf16.gmra.mxu0 %v308
        %v319 = vpop.f32.mrf.mxu0
        %v320 = vadd.f32 %v280, %v319
        %v321 = vpop.f32.mrf.mxu0
        %322 = vdwg.mxu0
        %v323 = vmax.f32 %v320, 0.0
        %v324 = vld [vmem:[%s4] sm:$0xf]
        %v325 = vld [vmem:[%s4 + $0x4] sm:$0xf]
        %v326 = vld [vmem:[%s4 + $0x8] sm:$0xf]
        %v327 = vld [vmem:[%s4 + $0xc] sm:$0xf]
        %v328 = vld [vmem:[%s4 + $0x10] sm:$0xf]
        %v329 = vld [vmem:[%s4 + $0x14] sm:$0xf]
        %v330 = vld [vmem:[%s4 + $0x18] sm:$0xf]
        %v331 = vld [vmem:[%s4 + $0x1c] sm:$0xf]
        %v332 = vld [vmem:[%s4 + $0x20] sm:$0xf]
        %v333 = vld [vmem:[%s4 + $0x24] sm:$0xf]
        %v334 = vld [vmem:[%s4 + $0x28] sm:$0xf]
        %v335 = vld [vmem:[%s4 + $0x2c] sm:$0xf]
        %v336 = vld [vmem:[%s4 + $0x30] sm:$0xf]
        %v337 = vld [vmem:[%s4 + $0x34] sm:$0xf]
        %v338 = vld [vmem:[%s4 + $0x38] sm:$0xf]
        %v339 = vld [vmem:[%s4 + $0x3c] sm:$0xf]
        %v340 = vld [vmem:[%s5] sm:$0x1]
        %v341 = vpack.c.bf16 %v323, %v323
        %v343 = vperm.slane %v340, 0
        %v361 = vunpack.c.l.b16 %v324
        %v362 = vunpack.c.l.b16 %v325
        %v363 = vunpack.c.l.b16 %v326
        %v364 = vunpack.c.l.b16 %v327
        %v365 = vunpack.c.l.b16 %v328
        %v366 = vunpack.c.l.b16 %v329
        %v367 = vunpack.c.l.b16 %v330
        %v368 = vunpack.c.l.b16 %v331
        %v369 = vunpack.c.l.b16 %v332
        %v370 = vunpack.c.l.b16 %v333
        %v371 = vunpack.c.l.b16 %v334
        %v372 = vunpack.c.l.b16 %v335
        %v373 = vunpack.c.l.b16 %v336
        %v374 = vunpack.c.l.b16 %v337
        %v375 = vunpack.c.l.b16 %v338
        %v376 = vunpack.c.l.b16 %v339
        %v377 = vpack.c.b16 %v362, %v361
        %v378 = vpack.c.b16 %v364, %v363
        %v379 = vpack.c.b16 %v366, %v365
        %v380 = vpack.c.b16 %v368, %v367
        %v381 = vpack.c.b16 %v370, %v369
        %v382 = vpack.c.b16 %v372, %v371
        %v383 = vpack.c.b16 %v374, %v373
        %v384 = vpack.c.b16 %v376, %v375
        %393 = vmatpush.bf16.msra.mxu0 %v384
        %394 = vmatpush.bf16.msra.mxu0 %v383
        %395 = vmatpush.bf16.msra.mxu0 %v382
        %396 = vmatpush.bf16.msra.mxu0 %v381
        %397 = vmatpush.bf16.msra.mxu0 %v380
        %398 = vmatpush.bf16.msra.mxu0 %v379
        %399 = vmatpush.bf16.msra.mxu0 %v378
        %400 = vmatpush.bf16.msra.mxu0 %v377
        %401 = vmatmul.bf16.gmra.mxu0 %v341
        %v402 = vpop.f32.mrf.mxu0
        %v403 = vadd.f32 %v343, %v402
        %v404 = vpop.f32.mrf.mxu0
        %405 = vdwg.mxu0
        %v406 = vld [vmem:[%s266] sm:$0xff]
        %v407 = vld [vmem:[%s266 + $0x8] sm:$0xff]
        %v408 = vld [vmem:[%s266 + $0x10] sm:$0xff]
        %v409 = vld [vmem:[%s266 + $0x18] sm:$0xff]
        %v410 = vld [vmem:[%s266 + $0x20] sm:$0xff]
        %v411 = vld [vmem:[%s266 + $0x28] sm:$0xff]
        %v412 = vld [vmem:[%s266 + $0x30] sm:$0xff]
        %v413 = vld [vmem:[%s266 + $0x38] sm:$0xff]
        %v414 = vld [vmem:[%s266 + $0x40] sm:$0xff]
        %v415 = vld [vmem:[%s266 + $0x48] sm:$0xff]
        %v416 = vld [vmem:[%s266 + $0x50] sm:$0xff]
        %v417 = vld [vmem:[%s266 + $0x58] sm:$0xff]
        %v418 = vld [vmem:[%s266 + $0x60] sm:$0xff]
        %v419 = vld [vmem:[%s266 + $0x68] sm:$0xff]
        %v420 = vld [vmem:[%s266 + $0x70] sm:$0xff]
        %v421 = vld [vmem:[%s266 + $0x78] sm:$0xff]
        %v422 = vpack.c.bf16 %v407, %v406
        %v423 = vpack.c.bf16 %v409, %v408
        %v424 = vpack.c.bf16 %v411, %v410
        %v425 = vpack.c.bf16 %v413, %v412
        %v426 = vpack.c.bf16 %v415, %v414
        %v427 = vpack.c.bf16 %v417, %v416
        %v428 = vpack.c.bf16 %v419, %v418
        %v429 = vpack.c.bf16 %v421, %v420
        %v431 = vsel %vm306, %v422, 0
        %v434 = vsel %vm306, %v423, 0
        %v437 = vsel %vm306, %v424, 0
        %v440 = vsel %vm306, %v425, 0
        %v443 = vsel %vm306, %v426, 0
        %v446 = vsel %vm306, %v427, 0
        %v449 = vsel %vm306, %v428, 0
        %v452 = vsel %vm306, %v429, 0
        %454 = vmatpush.bf16.msra.mxu0 0
        %455 = vmatpush.bf16.msra.mxu0 0
        %456 = vmatpush.bf16.msra.mxu0 0
        %457 = vmatpush.bf16.msra.mxu0 0
        %458 = vmatpush.bf16.msra.mxu0 %v301
        %459 = vmatpush.bf16.msra.mxu0 %v300
        %460 = vmatpush.bf16.msra.mxu0 %v299
        %461 = vmatpush.bf16.msra.mxu0 %v298
        %462 = vmatmul.bf16.gmra.mxu0 %v431
        %v463 = vpop.f32.mrf.mxu0
        %v464 = vadd.f32 %v280, %v463
        %v465 = vpop.f32.mrf.mxu0
        %v466 = vadd.f32 %v280, %v465
        %467 = vmatmul.bf16.gmra.mxu0 %v434
        %v468 = vpop.f32.mrf.mxu0
        %v469 = vadd.f32 %v280, %v468
        %v470 = vpop.f32.mrf.mxu0
        %v471 = vadd.f32 %v280, %v470
        %472 = vmatmul.bf16.gmra.mxu0 %v437
        %v473 = vpop.f32.mrf.mxu0
        %v474 = vadd.f32 %v280, %v473
        %v475 = vpop.f32.mrf.mxu0
        %v476 = vadd.f32 %v280, %v475
        %477 = vmatmul.bf16.gmra.mxu0 %v440
        %v478 = vpop.f32.mrf.mxu0
        %v479 = vadd.f32 %v280, %v478
        %v480 = vpop.f32.mrf.mxu0
        %v481 = vadd.f32 %v280, %v480
        %482 = vmatmul.bf16.gmra.mxu0 %v443
        %v483 = vpop.f32.mrf.mxu0
        %v484 = vadd.f32 %v280, %v483
        %v485 = vpop.f32.mrf.mxu0
        %v486 = vadd.f32 %v280, %v485
        %487 = vmatmul.bf16.gmra.mxu0 %v446
        %v488 = vpop.f32.mrf.mxu0
        %v489 = vadd.f32 %v280, %v488
        %v490 = vpop.f32.mrf.mxu0
        %v491 = vadd.f32 %v280, %v490
        %492 = vmatmul.bf16.gmra.mxu0 %v449
        %v493 = vpop.f32.mrf.mxu0
        %v494 = vadd.f32 %v280, %v493
        %v495 = vpop.f32.mrf.mxu0
        %v496 = vadd.f32 %v280, %v495
        %497 = vmatmul.bf16.gmra.mxu0 %v452
        %v498 = vpop.f32.mrf.mxu0
        %v499 = vadd.f32 %v280, %v498
        %v500 = vpop.f32.mrf.mxu0
        %v501 = vadd.f32 %v280, %v500
        %502 = vdwg.mxu0
        %v503 = vmax.f32 %v464, 0.0
        %v504 = vmax.f32 %v466, 0.0
        %v505 = vmax.f32 %v469, 0.0
        %v506 = vmax.f32 %v471, 0.0
        %v507 = vmax.f32 %v474, 0.0
        %v508 = vmax.f32 %v476, 0.0
        %v509 = vmax.f32 %v479, 0.0
        %v510 = vmax.f32 %v481, 0.0
        %v511 = vmax.f32 %v484, 0.0
        %v512 = vmax.f32 %v486, 0.0
        %v513 = vmax.f32 %v489, 0.0
        %v514 = vmax.f32 %v491, 0.0
        %v515 = vmax.f32 %v494, 0.0
        %v516 = vmax.f32 %v496, 0.0
        %v517 = vmax.f32 %v499, 0.0
        %v518 = vmax.f32 %v501, 0.0
        %v519 = vpack.c.bf16 %v504, %v503
        %v520 = vpack.c.bf16 %v506, %v505
        %v521 = vpack.c.bf16 %v508, %v507
        %v522 = vpack.c.bf16 %v510, %v509
        %v523 = vpack.c.bf16 %v512, %v511
        %v524 = vpack.c.bf16 %v514, %v513
        %v525 = vpack.c.bf16 %v516, %v515
        %v526 = vpack.c.bf16 %v518, %v517
        %527 = vmatpush.bf16.msra.mxu0 %v384
        %528 = vmatpush.bf16.msra.mxu0 %v383
        %529 = vmatpush.bf16.msra.mxu0 %v382
        %530 = vmatpush.bf16.msra.mxu0 %v381
        %531 = vmatpush.bf16.msra.mxu0 %v380
        %532 = vmatpush.bf16.msra.mxu0 %v379
        %533 = vmatpush.bf16.msra.mxu0 %v378
        %534 = vmatpush.bf16.msra.mxu0 %v377
        %535 = vmatmul.bf16.gmra.mxu0 %v519
        %v536 = vpop.f32.mrf.mxu0
        %v537 = vadd.f32 %v343, %v536
        %v538 = vpop.f32.mrf.mxu0
        %v539 = vadd.f32 %v343, %v538
        %540 = vmatmul.bf16.gmra.mxu0 %v520
        %v541 = vpop.f32.mrf.mxu0
        %v542 = vadd.f32 %v343, %v541
        %v543 = vpop.f32.mrf.mxu0
        %v544 = vadd.f32 %v343, %v543
        %545 = vmatmul.bf16.gmra.mxu0 %v521
        %v546 = vpop.f32.mrf.mxu0
        %v547 = vadd.f32 %v343, %v546
        %v548 = vpop.f32.mrf.mxu0
        %v549 = vadd.f32 %v343, %v548
        %550 = vmatmul.bf16.gmra.mxu0 %v522
        %v551 = vpop.f32.mrf.mxu0
        %v552 = vadd.f32 %v343, %v551
        %v553 = vpop.f32.mrf.mxu0
        %v554 = vadd.f32 %v343, %v553
        %555 = vmatmul.bf16.gmra.mxu0 %v523
        %v556 = vpop.f32.mrf.mxu0
        %v557 = vadd.f32 %v343, %v556
        %v558 = vpop.f32.mrf.mxu0
        %v559 = vadd.f32 %v343, %v558
        %560 = vmatmul.bf16.gmra.mxu0 %v524
        %v561 = vpop.f32.mrf.mxu0
        %v562 = vadd.f32 %v343, %v561
        %v563 = vpop.f32.mrf.mxu0
        %v564 = vadd.f32 %v343, %v563
        %565 = vmatmul.bf16.gmra.mxu0 %v525
        %v566 = vpop.f32.mrf.mxu0
        %v567 = vadd.f32 %v343, %v566
        %v568 = vpop.f32.mrf.mxu0
        %v569 = vadd.f32 %v343, %v568
        %570 = vmatmul.bf16.gmra.mxu0 %v526
        %v571 = vpop.f32.mrf.mxu0
        %v572 = vadd.f32 %v343, %v571
        %v573 = vpop.f32.mrf.mxu0
        %v574 = vadd.f32 %v343, %v573
        %575 = vdwg.mxu0
        %v576 = vpack.c.bf16 %v403, %v403
        %v577 = vpack.c.bf16 %v539, %v537
        %v578 = vpack.c.bf16 %v544, %v542
        %v579 = vpack.c.bf16 %v549, %v547
        %v580 = vpack.c.bf16 %v554, %v552
        %v581 = vpack.c.bf16 %v559, %v557
        %v582 = vpack.c.bf16 %v564, %v562
        %v583 = vpack.c.bf16 %v569, %v567
        %v584 = vpack.c.bf16 %v574, %v572
        %585 = vmatpush.bf16.xpose.msra.mxu0 %v584
        %586 = vmatpush.bf16.xpose.msra.mxu0 %v583
        %587 = vmatpush.bf16.xpose.msra.mxu0 %v582
        %588 = vmatpush.bf16.xpose.msra.mxu0 %v581
        %589 = vmatpush.bf16.xpose.msra.mxu0 %v580
        %590 = vmatpush.bf16.xpose.msra.mxu0 %v579
        %591 = vmatpush.bf16.xpose.msra.mxu0 %v578
        %592 = vmatpush.bf16.xpose.msra.mxu0 %v577
        %593 = vmatmul.bf16.gmra.mxu0 %v576
        %v594 = vpop.f32.mrf.mxu0
        %v595 = vadd.f32 0.0, %v594
        %v596 = vpop.f32.mrf.mxu0
        %597 = vdwg.mxu0
        %598 = vst [vmem:[%s257] sm:$0xff] %v595
        %s599 = sand.u32 %s164, 1
        %s600 = scalar_lea.sflag [#allocation3], %s599
        %s601 = sand.u32 %s164, 1
        %s602 = smul.addr %s601, 8
        %s603 = scalar_lea.vmem [#allocation2], %s602
        // Predicated region
        $region45: #{tpu_custom_call.1} parent=43 // pred_check
          %p604 = pneg %p174
        $region46: #{tpu_custom_call.1} parent=43 // pred_check_branch
          %606 = sbr.rel (%p604) target = $region48
        $region47: #{tpu_custom_call.1} parent=43 // pred_region
          %608 = vsyncadd %s600, 0
          %s609 = smul.addr %s20, 8
          %s610 = scalar_lea.hbm %s6, %s609
          %s612 = sshll.u32 %s603, 4
          %s613 = int_to_ptr.vmem [resolvable:$true] %s612
          %s614 = sshll.u32 %s610, 4
          %s615 = int_to_ptr.hbm [resolvable:$true] %s614
          %617 = dma.vmem_to_hbm [thread:$0]  %s613, 128, %s615, %s600
        $region48: #{tpu_custom_call.1} parent=43 // pred_fallthru
          _
      $region44: #{tpu_custom_call.1} parent=5 // pred_fallthru
        _
      %p618 = scmp.le.s32.totalorder 2, %s15
      // Predicated region
      $region49: #{tpu_custom_call.1} parent=5 // pred_check
        %p619 = pneg %p618
      $region50: #{tpu_custom_call.1} parent=5 // pred_check_branch
        %621 = sbr.rel (%p619) target = $region52
      $region51: #{tpu_custom_call.1} parent=5 // pred_region
        %s622 = ssub.s32 %s15, 2
        // Predicated region
        $region53: #{tpu_custom_call.1} parent=51 // pred_check
          %p623 = pneg %p180
        $region54: #{tpu_custom_call.1} parent=51 // pred_check_branch
          %625 = sbr.rel (%p623) target = $region56
        $region55: #{tpu_custom_call.1} parent=51 // pred_region
          %s626 = sand.u32 %s165, 1
          %s627 = scalar_lea.sflag [#allocation3], %s626
          %s628 = sand.u32 %s165, 1
          %s629 = smul.addr %s628, 8
          %s630 = scalar_lea.vmem [#allocation2], %s629
          %632 = dma.done %s627, 128
        $region56: #{tpu_custom_call.1} parent=51 // pred_fallthru
          _
      $region52: #{tpu_custom_call.1} parent=5 // pred_fallthru
        _
    $region6: #{tpu_custom_call.1} parent=1 // loop_footer
      %s19 = sadd.s32 1, %s15
    $region7: #{tpu_custom_call.1} parent=1 // loop_footer_branch
      %14 = sbr.rel target = $region3
    $region8: #{tpu_custom_call.1} parent=1 // loop_exit
      _
    %633 = vsyncpa [#allocation3], 1
    %s634 = scalar_lea.sflag [#allocation3], 1
    %635 = vsyncpa %s634, 1

</llo_original>
